<compile_context>
chip_gen: v6e
topology: v6e:2x2x1
jax: 0.10.0
libtpu: 0.0.40
codegen_flags: <defaults>
</compile_context>

<pallas_src>
import functools

import jax
import jax.numpy as jnp
from jax import lax
from jax.experimental import pallas as pl
from jax.experimental.pallas import tpu as pltpu


def _pick_tile(T: int) -> int:
    """Full T when small, otherwise the largest tile in {256,...,8} dividing T."""
    if T <= 256:
        return T
    for cand in (256, 128, 64, 32, 16, 8):
        if T % cand == 0:
            return cand
    return T


def _use_bf16_exp() -> bool:
    """bf16 EUP exp is a ~2x win on v6e/v7x; v5e has no bf16 EUP/VPU."""
    try:
        kind = jax.devices()[0].device_kind.lower()
    except Exception:
        return False
    return ("v6" in kind) or ("v7" in kind)


def _vmem_limit_bytes(tile: int, H: int, out_itemsize: int) -> int:
    """Estimate per-step VMEM and leave headroom; never ask for >48 MiB (v7x)."""
    bf16, f32 = 2, 4
    per_step = (
        2 * tile * H * bf16            # q block (double-buffered)
        + 2 * 2 * tile * H * bf16      # k, v blocks (double-buffered)
        + 2 * tile * H * out_itemsize  # out block (double-buffered)
        + 2 * tile * f32 + tile * H * f32   # m, l, acc scratch
        + 8 * tile * tile * f32        # score / mask / exp intermediates
    )
    return int(min(48 * 2**20, max(32 * 2**20, 2 * per_step)))


def flash_head_kernel(q_ref, k_ref, v_ref, o_ref, m_ref, l_ref, acc_ref,
                      *, q_tile: int, kv_tile: int, use_bf16_exp: bool):
    # q_ref : (1, tq, H) bf16   (query rows of this tile; scale pre-folded)
    # k_ref : (1, tk, H) bf16   v_ref : (1, tk, H) bf16
    # o_ref : (1, tq, H) x.dtype
    # m_ref/l_ref : (tq, 1) f32 scratch, acc_ref : (tq, H) f32 scratch
    i = pl.program_id(1)          # query-tile index
    j = pl.program_id(2)          # kv-tile index (innermost, "arbitrary")
    n_kv = pl.num_programs(2)

    @pl.when(j == 0)
    def _():
        m_ref[...] = jnp.full_like(m_ref, -jnp.inf)
        l_ref[...] = jnp.zeros_like(l_ref)
        acc_ref[...] = jnp.zeros_like(acc_ref)

    # Skip KV tiles strictly above the diagonal (fully causally masked).
    @pl.when(j <= i)
    def _():
        q = q_ref[0]                                              # (tq, H) bf16
        k = k_ref[0]                                              # (tk, H) bf16
        v = v_ref[0]                                              # (tk, H) bf16

        # Scores: contract on the last dim directly (no k transpose / XLU).
        s = lax.dot_general(q, k, dimension_numbers=(((1,), (1,)), ((), ())),
                            preferred_element_type=jnp.float32)   # (tq, tk) f32

        # Cheap causal mask: (tq,1) row iota vs (1,tk) col iota broadcast.
        # Only the diagonal tile actually masks anything; the select pass is
        # small compared with the exp.
        row = i * q_tile + lax.broadcasted_iota(jnp.int32, (q_tile, 1), 0)
        col = j * kv_tile + lax.broadcasted_iota(jnp.int32, (1, kv_tile), 1)
        s = jnp.where(col <= row, s, -jnp.inf)

        # Online softmax update (f32 statistics).
        m_prev = m_ref[...]
        m_new = jnp.maximum(m_prev, jnp.max(s, axis=-1, keepdims=True))
        alpha = jnp.exp(m_prev - m_new)                           # (tq, 1) f32
        if use_bf16_exp:
            p_mm = jnp.exp((s - m_new).astype(jnp.bfloat16))      # bf16 EUP
            p_sum = jnp.sum(p_mm, axis=-1, keepdims=True, dtype=jnp.float32)
        else:
            p = jnp.exp(s - m_new)                                # f32 EUP (v5e)
            p_sum = jnp.sum(p, axis=-1, keepdims=True)
            p_mm = p.astype(jnp.bfloat16)

        l_ref[...] = alpha * l_ref[...] + p_sum
        acc_ref[...] = alpha * acc_ref[...] + jnp.dot(
            p_mm, v, preferred_element_type=jnp.float32)
        m_ref[...] = m_new

    @pl.when(j == n_kv - 1)
    def _():
        # TODO(synk): dropout is identity here (eval mode / config.dropout==0).
        inv_l = pl.reciprocal(l_ref[...], approx=True)
        o_ref[0] = (acc_ref[...] * inv_l).astype(o_ref.dtype)


def head_forward(x, w_key, w_query, w_value):
    """x: (B, T, C); w_*: (head_size, n_embd). Returns (B, T, head_size)."""
    B, T, C = x.shape
    H = w_key.shape[0]
    tile = _pick_tile(T)
    n_tiles = T // tile

    # Fused QKV projection once per batch, outside the kernel (lane width 3H),
    # with the H^-0.5 scale folded into Wq.  Feed the MXU bf16 operands.
    scale = float(H) ** -0.5
    w_qkv = jnp.concatenate(
        [w_query.T * scale, w_key.T, w_value.T], axis=1).astype(jnp.bfloat16)
    qkv = jnp.einsum("btc,ch->bth", x.astype(jnp.bfloat16), w_qkv,
                     preferred_element_type=jnp.float32)          # (B, T, 3H)
    q = qkv[..., :H].astype(jnp.bfloat16)
    k = qkv[..., H:2 * H].astype(jnp.bfloat16)
    v = qkv[..., 2 * H:].astype(jnp.bfloat16)

    kernel = functools.partial(
        flash_head_kernel, q_tile=tile, kv_tile=tile,
        use_bf16_exp=_use_bf16_exp())

    # KV blocks above the diagonal are never used: clamp their block index to
    # the diagonal block so no fresh DMA is issued for skipped tiles.
    kv_index_map = lambda b, i, j: (b, jnp.minimum(j, i), 0)

    return pl.pallas_call(
        kernel,
        out_shape=jax.ShapeDtypeStruct((B, T, H), x.dtype),
        grid_spec=pltpu.PrefetchScalarGridSpec(
            num_scalar_prefetch=0,
            grid=(B, n_tiles, n_tiles),
            in_specs=[
                pl.BlockSpec((1, tile, H), lambda b, i, j: (b, i, 0)),  # q
                pl.BlockSpec((1, tile, H), kv_index_map),               # k
                pl.BlockSpec((1, tile, H), kv_index_map),               # v
            ],
            out_specs=pl.BlockSpec((1, tile, H), lambda b, i, j: (b, i, 0)),
            scratch_shapes=[
                pltpu.VMEM((tile, 1), jnp.float32),   # m (running max)
                pltpu.VMEM((tile, 1), jnp.float32),   # l (running denom)
                pltpu.VMEM((tile, H), jnp.float32),   # acc
            ],
        ),
        compiler_params=pltpu.CompilerParams(
            dimension_semantics=("parallel", "parallel", "arbitrary"),
            vmem_limit_bytes=_vmem_limit_bytes(tile, H, x.dtype.itemsize),
        ),
    )(q, k, v)


def head_reference(x, w_key, w_query, w_value):
    """Plain-JAX f32 reference mirroring the PyTorch forward (dropout=identity)."""
    k = x @ w_key.T
    q = x @ w_query.T
    v = x @ w_value.T
    scale = k.shape[-1] ** -0.5
    wei = jnp.einsum("btd,bsd->bts", q, k) * scale
    T = x.shape[1]
    mask = jnp.tril(jnp.ones((T, T), dtype=bool))
    wei = jnp.where(mask[None], wei, -jnp.inf)
    wei = jax.nn.softmax(wei, axis=-1)
    return wei @ v


if __name__ == "__main__":
    # Small config: block_size (T) = 8, n_embd (C) = 32, head_size = 16, batch = 2
    B, T, C, H = 2, 8, 32, 16

    key = jax.random.PRNGKey(0)
    kx, kk, kq, kv = jax.random.split(key, 4)

    x = jax.random.normal(kx, (B, T, C), dtype=jnp.float32)
    # deterministic nn.Linear-style weights (head_size, n_embd), bias=False
    w_key = jax.random.normal(kk, (H, C), dtype=jnp.float32) * (C ** -0.5)
    w_query = jax.random.normal(kq, (H, C), dtype=jnp.float32) * (C ** -0.5)
    w_value = jax.random.normal(kv, (H, C), dtype=jnp.float32) * (C ** -0.5)

    out = head_forward(x, w_key, w_query, w_value)
    out = jax.block_until_ready(out)

    ref = head_reference(x, w_key, w_query, w_value)
    assert out.shape == (B, T, H)
    # bf16 MXU inputs + approx reciprocal loosen tolerance vs. the f32 reference.
    assert jnp.allclose(out, ref, atol=3e-2, rtol=3e-2)

    print("KERNEL_OK")
</pallas_src>

<mosaic_0001>
module attributes {stable_mosaic.version = 11 : i64} {
  func.func @flash_head_kernel(%arg0: i32, %arg1: i32, %arg2: i32, %arg3: memref<1x8x16xbf16, #tpu.memory_space<vmem>>, %arg4: memref<1x8x16xbf16, #tpu.memory_space<vmem>>, %arg5: memref<1x8x16xbf16, #tpu.memory_space<vmem>>, %arg6: memref<1x8x16xf32, #tpu.memory_space<vmem>>, %arg7: memref<8x1xf32, #tpu.memory_space<vmem>>, %arg8: memref<8x1xf32, #tpu.memory_space<vmem>>, %arg9: memref<8x16xf32, #tpu.memory_space<vmem>>) attributes {dimension_semantics = [#tpu.dimension_semantics<parallel>, #tpu.dimension_semantics<parallel>, #tpu.dimension_semantics<arbitrary>], iteration_bounds = array<i64: 2, 1, 1>, scalar_prefetch = 0 : i64, scratch_operands = 3 : i64, tpu.core_type = #tpu.core_type<tc>, window_params = [{transform_indices = @transform_0, window_bounds = array<i64: 1, 8, 16>}, {transform_indices = @transform_1, window_bounds = array<i64: 1, 8, 16>}, {transform_indices = @transform_2, window_bounds = array<i64: 1, 8, 16>}, {transform_indices = @transform_3, window_bounds = array<i64: 1, 8, 16>}]} {
    %c0_i32 = arith.constant 0 : i32
    %0 = arith.cmpi eq, %arg2, %c0_i32 : i32
    %1 = arith.extui %0 : i1 to i32
    %c0_i32_0 = arith.constant 0 : i32
    %2 = arith.cmpi ne, %1, %c0_i32_0 : i32
    scf.if %2 {
      %cst = arith.constant 0xFF800000 : f32
      %9 = vector.broadcast %cst : f32 to vector<8x1xf32>
      %c0 = arith.constant 0 : index
      %c0_4 = arith.constant 0 : index
      %10 = vector.load %arg7[%c0, %c0_4] : memref<8x1xf32, #tpu.memory_space<vmem>>, vector<8x1xf32>
      tpu.vector_store %arg7[%c0, %c0_4], %9 {strides = array<i32>} : memref<8x1xf32, #tpu.memory_space<vmem>>, vector<8x1xf32>,
      %cst_5 = arith.constant 0.000000e+00 : f32
      %11 = vector.broadcast %cst_5 : f32 to vector<8x1xf32>
      %c0_6 = arith.constant 0 : index
      %c0_7 = arith.constant 0 : index
      %12 = vector.load %arg8[%c0_6, %c0_7] : memref<8x1xf32, #tpu.memory_space<vmem>>, vector<8x1xf32>
      tpu.vector_store %arg8[%c0_6, %c0_7], %11 {strides = array<i32>} : memref<8x1xf32, #tpu.memory_space<vmem>>, vector<8x1xf32>,
      %cst_8 = arith.constant 0.000000e+00 : f32
      %13 = vector.broadcast %cst_8 : f32 to vector<8x16xf32>
      %c0_9 = arith.constant 0 : index
      %c0_10 = arith.constant 0 : index
      %14 = vector.load %arg9[%c0_9, %c0_10] : memref<8x16xf32, #tpu.memory_space<vmem>>, vector<8x16xf32>
      tpu.vector_store %arg9[%c0_9, %c0_10], %13 {strides = array<i32>} : memref<8x16xf32, #tpu.memory_space<vmem>>, vector<8x16xf32>,
    } else {
    }
    %3 = arith.cmpi sle, %arg2, %arg1 : i32
    %4 = arith.extui %3 : i1 to i32
    %c0_i32_1 = arith.constant 0 : i32
    %5 = arith.cmpi ne, %4, %c0_i32_1 : i32
    scf.if %5 {
      %c0 = arith.constant 0 : index
      %c0_4 = arith.constant 0 : index
      %c0_5 = arith.constant 0 : index
      %9 = vector.load %arg3[%c0, %c0_4, %c0_5] : memref<1x8x16xbf16, #tpu.memory_space<vmem>>, vector<1x8x16xbf16>
      %10 = vector.shape_cast %9 : vector<1x8x16xbf16> to vector<8x16xbf16>
      %c0_6 = arith.constant 0 : index
      %c0_7 = arith.constant 0 : index
      %c0_8 = arith.constant 0 : index
      %11 = vector.load %arg4[%c0_6, %c0_7, %c0_8] : memref<1x8x16xbf16, #tpu.memory_space<vmem>>, vector<1x8x16xbf16>
      %12 = vector.shape_cast %11 : vector<1x8x16xbf16> to vector<8x16xbf16>
      %c0_9 = arith.constant 0 : index
      %c0_10 = arith.constant 0 : index
      %c0_11 = arith.constant 0 : index
      %13 = vector.load %arg5[%c0_9, %c0_10, %c0_11] : memref<1x8x16xbf16, #tpu.memory_space<vmem>>, vector<1x8x16xbf16>
      %14 = vector.shape_cast %13 : vector<1x8x16xbf16> to vector<8x16xbf16>
      %cst = arith.constant dense<0.000000e+00> : vector<8x8xf32>
      %15 = tpu.matmul %10, %12, %cst {dimension_numbers = #tpu.dot_dimension_numbers<[1], [1], [0], [0], [0, 0, 1, 0], [], []>} : vector<8x16xbf16>, vector<8x16xbf16>, vector<8x8xf32> -> vector<8x8xf32>
      %c8_i32 = arith.constant 8 : i32
      %16 = arith.muli %arg1, %c8_i32 : i32
      %17 = tpu.iota {dimensions = array<i32: 0>} : vector<8x1xi32>
      %18 = vector.broadcast %16 : i32 to vector<8x1xi32>
      %19 = arith.addi %18, %17 : vector<8x1xi32>
      %c8_i32_12 = arith.constant 8 : i32
      %20 = arith.muli %arg2, %c8_i32_12 : i32
      %21 = tpu.iota {dimensions = array<i32: 1>} : vector<1x8xi32>
      %22 = vector.broadcast %20 : i32 to vector<1x8xi32>
      %23 = arith.addi %22, %21 : vector<1x8xi32>
      %24 = vector.broadcast %23 : vector<1x8xi32> to vector<8x8xi32>
      %25 = vector.broadcast %19 : vector<8x1xi32> to vector<8x8xi32>
      %26 = arith.cmpi sle, %24, %25 : vector<8x8xi32>
      %cst_13 = arith.constant 0xFF800000 : f32
      %27 = vector.broadcast %cst_13 : f32 to vector<8x8xf32>
      %28 = arith.select %26, %15, %27 : vector<8x8xi1>, vector<8x8xf32>
      %c0_14 = arith.constant 0 : index
      %c0_15 = arith.constant 0 : index
      %29 = vector.load %arg7[%c0_14, %c0_15] : memref<8x1xf32, #tpu.memory_space<vmem>>, vector<8x1xf32>
      %cst_16 = arith.constant dense<0xFF800000> : vector<8xf32>
      %30 = vector.multi_reduction <maximumf>, %28, %cst_16 [1] : vector<8x8xf32> to vector<8xf32>
      %31 = vector.shape_cast %30 : vector<8xf32> to vector<8x1xf32>
      %32 = arith.maximumf %29, %31 : vector<8x1xf32>
      %33 = arith.subf %29, %32 : vector<8x1xf32>
      %34 = math.exp %33 : vector<8x1xf32>
      %35 = vector.broadcast %32 : vector<8x1xf32> to vector<8x8xf32>
      %36 = arith.subf %28, %35 : vector<8x8xf32>
      %37 = math.exp %36 : vector<8x8xf32>
      %cst_17 = arith.constant dense<0.000000e+00> : vector<8xf32>
      %38 = vector.multi_reduction <add>, %37, %cst_17 [1] : vector<8x8xf32> to vector<8xf32>
      %39 = vector.shape_cast %38 : vector<8xf32> to vector<8x1xf32>
      %40 = arith.truncf %37 : vector<8x8xf32> to vector<8x8xbf16>
      %c0_18 = arith.constant 0 : index
      %c0_19 = arith.constant 0 : index
      %41 = vector.load %arg8[%c0_18, %c0_19] : memref<8x1xf32, #tpu.memory_space<vmem>>, vector<8x1xf32>
      %42 = arith.mulf %34, %41 : vector<8x1xf32>
      %43 = arith.addf %42, %39 : vector<8x1xf32>
      %c0_20 = arith.constant 0 : index
      %c0_21 = arith.constant 0 : index
      %44 = vector.load %arg8[%c0_20, %c0_21] : memref<8x1xf32, #tpu.memory_space<vmem>>, vector<8x1xf32>
      tpu.vector_store %arg8[%c0_20, %c0_21], %43 {strides = array<i32>} : memref<8x1xf32, #tpu.memory_space<vmem>>, vector<8x1xf32>,
      %c0_22 = arith.constant 0 : index
      %c0_23 = arith.constant 0 : index
      %45 = vector.load %arg9[%c0_22, %c0_23] : memref<8x16xf32, #tpu.memory_space<vmem>>, vector<8x16xf32>
      %46 = vector.broadcast %34 : vector<8x1xf32> to vector<8x16xf32>
      %47 = arith.mulf %46, %45 : vector<8x16xf32>
      %cst_24 = arith.constant dense<0.000000e+00> : vector<8x16xf32>
      %48 = tpu.matmul %40, %14, %cst_24 {dimension_numbers = #tpu.dot_dimension_numbers<[1], [0], [0], [1], [0, 0, 1, 1], [], []>} : vector<8x8xbf16>, vector<8x16xbf16>, vector<8x16xf32> -> vector<8x16xf32>
      %49 = arith.addf %47, %48 : vector<8x16xf32>
      %c0_25 = arith.constant 0 : index
      %c0_26 = arith.constant 0 : index
      %50 = vector.load %arg9[%c0_25, %c0_26] : memref<8x16xf32, #tpu.memory_space<vmem>>, vector<8x16xf32>
      tpu.vector_store %arg9[%c0_25, %c0_26], %49 {strides = array<i32>} : memref<8x16xf32, #tpu.memory_space<vmem>>, vector<8x16xf32>,
      %c0_27 = arith.constant 0 : index
      %c0_28 = arith.constant 0 : index
      %51 = vector.load %arg7[%c0_27, %c0_28] : memref<8x1xf32, #tpu.memory_space<vmem>>, vector<8x1xf32>
      tpu.vector_store %arg7[%c0_27, %c0_28], %32 {strides = array<i32>} : memref<8x1xf32, #tpu.memory_space<vmem>>, vector<8x1xf32>,
    } else {
    }
    %c0_i32_2 = arith.constant 0 : i32
    %6 = arith.cmpi eq, %arg2, %c0_i32_2 : i32
    %7 = arith.extui %6 : i1 to i32
    %c0_i32_3 = arith.constant 0 : i32
    %8 = arith.cmpi ne, %7, %c0_i32_3 : i32
    scf.if %8 {
      %c0 = arith.constant 0 : index
      %c0_4 = arith.constant 0 : index
      %9 = vector.load %arg8[%c0, %c0_4] : memref<8x1xf32, #tpu.memory_space<vmem>>, vector<8x1xf32>
      %10 = tpu.reciprocal %9 {approx = true} : vector<8x1xf32> -> vector<8x1xf32>
      %c0_5 = arith.constant 0 : index
      %c0_6 = arith.constant 0 : index
      %11 = vector.load %arg9[%c0_5, %c0_6] : memref<8x16xf32, #tpu.memory_space<vmem>>, vector<8x16xf32>
      %12 = vector.broadcast %10 : vector<8x1xf32> to vector<8x16xf32>
      %13 = arith.mulf %11, %12 : vector<8x16xf32>
      %c0_7 = arith.constant 0 : index
      %c0_8 = arith.constant 0 : index
      %c0_9 = arith.constant 0 : index
      %14 = vector.load %arg6[%c0_7, %c0_8, %c0_9] : memref<1x8x16xf32, #tpu.memory_space<vmem>>, vector<1x8x16xf32>
      %15 = vector.shape_cast %14 : vector<1x8x16xf32> to vector<8x16xf32>
      %16 = vector.shape_cast %13 : vector<8x16xf32> to vector<1x8x16xf32>
      tpu.vector_store %arg6[%c0_7, %c0_8, %c0_9], %16 {strides = array<i32>} : memref<1x8x16xf32, #tpu.memory_space<vmem>>, vector<1x8x16xf32>,
    } else {
    }
    return
  }
  func.func @transform_0(%arg0: i32, %arg1: i32, %arg2: i32) -> (i32, i32, i32) {
    %c0_i32 = arith.constant 0 : i32
    %c0_i32_0 = arith.constant 0 : i32
    return %arg0, %arg1, %c0_i32 : i32, i32, i32
  }
  func.func @transform_1(%arg0: i32, %arg1: i32, %arg2: i32) -> (i32, i32, i32) {
    %0 = arith.minsi %arg2, %arg1 : i32
    %c0_i32 = arith.constant 0 : i32
    %c0_i32_0 = arith.constant 0 : i32
    return %arg0, %0, %c0_i32 : i32, i32, i32
  }
  func.func @transform_2(%arg0: i32, %arg1: i32, %arg2: i32) -> (i32, i32, i32) {
    %0 = arith.minsi %arg2, %arg1 : i32
    %c0_i32 = arith.constant 0 : i32
    %c0_i32_0 = arith.constant 0 : i32
    return %arg0, %0, %c0_i32 : i32, i32, i32
  }
  func.func @transform_3(%arg0: i32, %arg1: i32, %arg2: i32) -> (i32, i32, i32) {
    %c0_i32 = arith.constant 0 : i32
    %c0_i32_0 = arith.constant 0 : i32
    return %arg0, %arg1, %c0_i32 : i32, i32, i32
  }
}

</mosaic_0001>

<llo_original>
// kernel: tpu_custom_call.1
$region0: #{tpu_custom_call.1}
  #allocation0 [shape = 'u32[]', space=smem, size = 0x4, offset = 0x4, fixed_abs, tag = 'smem constant byte address 0x4 - core index']
  #allocation1 [shape = 'u32[144,128]{1,0:T(1,128)}', space=vmem, size = 0x12000, scoped, tag = 'internal scratch']
  #allocation2 [shape = 'f32[8,1]{1,0:T(8,128)}', space=vmem, size = 0x1000, scoped, tag = 'scratch operand']
  #allocation3 [shape = 'f32[8,1]{1,0:T(8,128)}', space=vmem, size = 0x1000, scoped, tag = 'scratch operand']
  #allocation4 [shape = 'f32[8,16]{1,0:T(8,128)}', space=vmem, size = 0x1000, scoped, tag = 'scratch operand']
  %s0 = inlined_call_operand.hbm [shape: bf16[2,8,16], index: 0, kind: input, shape index: {}]
  %s1 = inlined_call_operand.hbm [shape: bf16[2,8,16], index: 1, kind: input, shape index: {}]
  %s2 = inlined_call_operand.hbm [shape: bf16[2,8,16], index: 2, kind: input, shape index: {}]
  %s3 = inlined_call_operand.hbm [shape: f32[2,8,16], index: 3, kind: output, shape index: {}]
  %s4 = sld [smem:[#allocation0]]
  $region69: #{tpu_custom_call.1} parent=0
    _
  %s6 = ssub.s32 1, %s4
  %s7 = scalar_select 0, %s6, %s4
  $region1: #{tpu_custom_call.1} parent=0
    #allocation5 [shape = 'u8[4096]{0}', space=vmem, size = 0x1000, scoped, tag = 'input window, operand 0']
    #allocation6 [shape = 's32[2]{0}', space=sflag, size = 0x8, scoped, tag = 'scoped memory for tpu_custom_call.1']
    #allocation7 [shape = 's32[2]{0}', space=sflag, size = 0x8, scoped, tag = 'scoped memory for tpu_custom_call.1']
    #allocation8 [shape = 'u8[4096]{0}', space=vmem, size = 0x1000, scoped, tag = 'input window, operand 1']
    #allocation9 [shape = 's32[2]{0}', space=sflag, size = 0x8, scoped, tag = 'scoped memory for tpu_custom_call.1']
    #allocation10 [shape = 'u8[4096]{0}', space=vmem, size = 0x1000, scoped, tag = 'input window, operand 2']
    #allocation11 [shape = 'u8[8192]{0}', space=vmem, size = 0x2000, scoped, tag = 'output window, operand 0']
    %8 = vsyncpa [#allocation6], 0
    %s9 = scalar_lea.sflag [#allocation6], 1
    %10 = vsyncpa %s9, 0
    %11 = vsyncpa [#allocation9], 0
    %s12 = scalar_lea.sflag [#allocation9], 1
    %13 = vsyncpa %s12, 0
    %14 = vsyncpa [#allocation7], 0
    %s15 = scalar_lea.sflag [#allocation7], 1
    %16 = vsyncpa %s15, 0
    loop: start=0, step=1, limit=4
    $region2: #{tpu_custom_call.1} parent=1 // loop_pre_header
      _
    $region3: #{tpu_custom_call.1} parent=1 // loop_header
      %s18 = sphi 0, %s22
      %p19 = scmp.ge.s32.totalorder %s18, 4
      %s25 = sphi 0, %s44
      %s26 = sphi 0, %s40
      %s27 = sphi 0, %s36
      %s28 = sphi 0, %s25
      %s29 = sphi 0, %s26
      %s30 = sphi 0, %s27
      %s31 = sphi 0, %s28
      %s32 = sphi 0, %s29
      %s33 = sphi 0, %s30
      %s49 = sphi 0, %s51
      %s52 = sphi 0, %s49
      %s53 = sphi 0, %s52
      %s69 = sphi 0, %s53
      %s81 = sphi 0, %s83
      %s84 = sphi 0, %s81
      %s85 = sphi 0, %s84
      %s101 = sphi 0, %s85
      %s113 = sphi 0, %s115
      %s116 = sphi 0, %s113
      %s117 = sphi 0, %s116
      %s133 = sphi 0, %s117
      %s141 = sphi 0, %s143
      %s144 = sphi 0, %s141
      %s145 = sphi 0, %s144
      %s161 = sphi 0, %s145
    $region4: #{tpu_custom_call.1} parent=1 // loop_header_branch
      %21 = sbr.rel (%p19) target = $region8
    $region5: #{tpu_custom_call.1} parent=1 // loop_body
      %s23 = ssub.s32 %s18, 1
      %s24 = ssub.s32 %s18, 2
      %s34 = sadd.s32 1, %s27
      %p35 = scmp.ge.s32.totalorder %s34, 1
      %s36 = scalar_select %p35, 0, %s34
      %s37 = sadd.s32 1, %s26
      %s38 = scalar_select %p35, %s37, %s26
      %p39 = scmp.ge.s32.totalorder %s38, 1
      %s40 = scalar_select %p39, 0, %s38
      %s41 = sadd.s32 1, %s25
      %s42 = scalar_select %p39, %s41, %s25
      %p43 = scmp.ge.s32.totalorder %s42, 2
      %s44 = scalar_select %p43, 0, %s42
      %s45 = ssub.s32 %s25, %s44
      %s46 = ssub.s32 %s26, %s40
      %s47 = sor.u32 %s45, %s46
      %p48 = scmp.eq.s32.totalorder %s47, 0
      %s50 = sadd.s32 %s49, 1
      %s51 = scalar_select %p48, %s49, %s50
      %p54 = pneg %p48
      %p55 = scmp.eq.s32.totalorder %s18, 1
      %p56 = por %p54, %p55
      %p57 = scmp.ne.s32.totalorder %s49, %s52
      %p58 = scmp.eq.s32.totalorder %s18, 0
      %p59 = por %p57, %p58
      %p60 = scmp.ne.s32.totalorder %s49, %s52
      %p61 = scmp.eq.s32.totalorder %s23, 1
      %p62 = por %p60, %p61
      %p63 = scmp.ne.s32.totalorder %s52, %s53
      %p64 = scmp.eq.s32.totalorder %s23, 0
      %p65 = por %p63, %p64
      %p66 = scmp.ne.s32.totalorder %s52, %s53
      %p67 = scmp.eq.s32.totalorder %s24, 1
      %p68 = por %p66, %p67
      %p70 = scmp.ne.s32.totalorder %s53, %s69
      %p71 = scmp.eq.s32.totalorder %s24, 0
      %p72 = por %p70, %p71
      %p73 = scmp.lt.s32.totalorder %s27, %s26
      %s74 = scalar_select %p73, %s27, %s26
      %p75 = scmp.lt.s32.totalorder %s36, %s40
      %s76 = scalar_select %p75, %s36, %s40
      %s77 = ssub.s32 %s25, %s44
      %s78 = ssub.s32 %s74, %s76
      %s79 = sor.u32 %s77, %s78
      %p80 = scmp.eq.s32.totalorder %s79, 0
      %s82 = sadd.s32 %s81, 1
      %s83 = scalar_select %p80, %s81, %s82
      %p86 = pneg %p80
      %p87 = scmp.eq.s32.totalorder %s18, 1
      %p88 = por %p86, %p87
      %p89 = scmp.ne.s32.totalorder %s81, %s84
      %p90 = scmp.eq.s32.totalorder %s18, 0
      %p91 = por %p89, %p90
      %p92 = scmp.ne.s32.totalorder %s81, %s84
      %p93 = scmp.eq.s32.totalorder %s23, 1
      %p94 = por %p92, %p93
      %p95 = scmp.ne.s32.totalorder %s84, %s85
      %p96 = scmp.eq.s32.totalorder %s23, 0
      %p97 = por %p95, %p96
      %p98 = scmp.ne.s32.totalorder %s84, %s85
      %p99 = scmp.eq.s32.totalorder %s24, 1
      %p100 = por %p98, %p99
      %p102 = scmp.ne.s32.totalorder %s85, %s101
      %p103 = scmp.eq.s32.totalorder %s24, 0
      %p104 = por %p102, %p103
      %p105 = scmp.lt.s32.totalorder %s27, %s26
      %s106 = scalar_select %p105, %s27, %s26
      %p107 = scmp.lt.s32.totalorder %s36, %s40
      %s108 = scalar_select %p107, %s36, %s40
      %s109 = ssub.s32 %s25, %s44
      %s110 = ssub.s32 %s106, %s108
      %s111 = sor.u32 %s109, %s110
      %p112 = scmp.eq.s32.totalorder %s111, 0
      %s114 = sadd.s32 %s113, 1
      %s115 = scalar_select %p112, %s113, %s114
      %p118 = pneg %p112
      %p119 = scmp.eq.s32.totalorder %s18, 1
      %p120 = por %p118, %p119
      %p121 = scmp.ne.s32.totalorder %s113, %s116
      %p122 = scmp.eq.s32.totalorder %s18, 0
      %p123 = por %p121, %p122
      %p124 = scmp.ne.s32.totalorder %s113, %s116
      %p125 = scmp.eq.s32.totalorder %s23, 1
      %p126 = por %p124, %p125
      %p127 = scmp.ne.s32.totalorder %s116, %s117
      %p128 = scmp.eq.s32.totalorder %s23, 0
      %p129 = por %p127, %p128
      %p130 = scmp.ne.s32.totalorder %s116, %s117
      %p131 = scmp.eq.s32.totalorder %s24, 1
      %p132 = por %p130, %p131
      %p134 = scmp.ne.s32.totalorder %s117, %s133
      %p135 = scmp.eq.s32.totalorder %s24, 0
      %p136 = por %p134, %p135
      %s137 = ssub.s32 %s25, %s44
      %s138 = ssub.s32 %s26, %s40
      %s139 = sor.u32 %s137, %s138
      %p140 = scmp.eq.s32.totalorder %s139, 0
      %s142 = sadd.s32 %s141, 1
      %s143 = scalar_select %p140, %s141, %s142
      %p146 = pneg %p140
      %p147 = scmp.eq.s32.totalorder %s18, 1
      %p148 = por %p146, %p147
      %p149 = scmp.ne.s32.totalorder %s141, %s144
      %p150 = scmp.eq.s32.totalorder %s18, 0
      %p151 = por %p149, %p150
      %p152 = scmp.ne.s32.totalorder %s141, %s144
      %p153 = scmp.eq.s32.totalorder %s23, 1
      %p154 = por %p152, %p153
      %p155 = scmp.ne.s32.totalorder %s144, %s145
      %p156 = scmp.eq.s32.totalorder %s23, 0
      %p157 = por %p155, %p156
      %p158 = scmp.ne.s32.totalorder %s144, %s145
      %p159 = scmp.eq.s32.totalorder %s24, 1
      %p160 = por %p158, %p159
      %p162 = scmp.ne.s32.totalorder %s145, %s161
      %p163 = scmp.eq.s32.totalorder %s24, 0
      %p164 = por %p162, %p163
      %p165 = scmp.le.s32.totalorder 1, %s18
      %p166 = scmp.lt.s32.totalorder %s18, 3
      %p167 = pnand %p165, %p166
      %p168 = pneg %p167
      // Predicated region
      $region9: #{tpu_custom_call.1} parent=5 // pred_check
        _
      $region10: #{tpu_custom_call.1} parent=5 // pred_check_branch
        %170 = sbr.rel (%p167) target = $region12
      $region11: #{tpu_custom_call.1} parent=5 // pred_region
        %s171 = ssub.s32 %s18, 1
      $region12: #{tpu_custom_call.1} parent=5 // pred_fallthru
        _
      %p172 = scmp.lt.s32.totalorder %s18, 2
      // Predicated region
      $region13: #{tpu_custom_call.1} parent=5 // pred_check
        %p173 = pneg %p172
      $region14: #{tpu_custom_call.1} parent=5 // pred_check_branch
        %175 = sbr.rel (%p173) target = $region16
      $region15: #{tpu_custom_call.1} parent=5 // pred_region
        // Predicated region
        $region17: #{tpu_custom_call.1} parent=15 // pred_check
          %p176 = pneg %p59
        $region18: #{tpu_custom_call.1} parent=15 // pred_check_branch
          %178 = sbr.rel (%p176) target = $region20
        $region19: #{tpu_custom_call.1} parent=15 // pred_region
          %s179 = sand.u32 %s49, 1
          %s180 = scalar_lea.sflag [#allocation6], %s179
          %s181 = sand.u32 %s49, 1
          %s182 = smul.addr %s181, 4
          %s183 = scalar_lea.vmem [#allocation5], %s182
          %s185 = ssub.s32 64, 64
          %186 = vsyncadd %s180, %s185
          %s187 = sadd.s32 %s26, %s25
          %s188 = smul.addr %s187, 64
          %s189 = scalar_lea.hbm %s0, %s188
          %s191 = sshll.u32 %s183, 4
          %s192 = int_to_ptr.vmem [resolvable:$true] %s191
          %194 = dma.hbm_to_vmem [thread:$0]  %s189, 64, %s192, %s180
        $region20: #{tpu_custom_call.1} parent=15 // pred_fallthru
          _
        // Predicated region
        $region21: #{tpu_custom_call.1} parent=15 // pred_check
          %p195 = pneg %p91
        $region22: #{tpu_custom_call.1} parent=15 // pred_check_branch
          %197 = sbr.rel (%p195) target = $region24
        $region23: #{tpu_custom_call.1} parent=15 // pred_region
          %s198 = sand.u32 %s18, 1
          %s199 = scalar_lea.sflag [#allocation9], %s198
          %s200 = sand.u32 %s81, 1
          %s201 = smul.addr %s200, 4
          %s202 = scalar_lea.vmem [#allocation8], %s201
          %p203 = scmp.lt.s32.totalorder %s27, %s26
          %s204 = scalar_select %p203, %s27, %s26
          %s206 = ssub.s32 64, 64
          %207 = vsyncadd %s199, %s206
          %s208 = sadd.s32 %s204, %s25
          %s209 = smul.addr %s208, 64
          %s210 = scalar_lea.hbm %s1, %s209
          %s212 = sshll.u32 %s202, 4
          %s213 = int_to_ptr.vmem [resolvable:$true] %s212
          %215 = dma.hbm_to_vmem [thread:$0]  %s210, 64, %s213, %s199
        $region24: #{tpu_custom_call.1} parent=15 // pred_fallthru
          _
        // Predicated region
        $region25: #{tpu_custom_call.1} parent=15 // pred_check
          %p216 = pneg %p123
        $region26: #{tpu_custom_call.1} parent=15 // pred_check_branch
          %218 = sbr.rel (%p216) target = $region28
        $region27: #{tpu_custom_call.1} parent=15 // pred_region
          %s219 = sand.u32 %s18, 1
          %s220 = scalar_lea.sflag [#allocation9], %s219
          %s221 = sand.u32 %s113, 1
          %s222 = smul.addr %s221, 4
          %s223 = scalar_lea.vmem [#allocation10], %s222
          %p224 = scmp.lt.s32.totalorder %s27, %s26
          %s225 = scalar_select %p224, %s27, %s26
          %s227 = ssub.s32 64, 64
          %228 = vsyncadd %s220, %s227
          %s229 = sadd.s32 %s225, %s25
          %s230 = smul.addr %s229, 64
          %s231 = scalar_lea.hbm %s2, %s230
          %s233 = sshll.u32 %s223, 4
          %s234 = int_to_ptr.vmem [resolvable:$true] %s233
          %236 = dma.hbm_to_vmem [thread:$0]  %s231, 64, %s234, %s220
        $region28: #{tpu_custom_call.1} parent=15 // pred_fallthru
          _
      $region16: #{tpu_custom_call.1} parent=5 // pred_fallthru
        _
      %p237 = scmp.le.s32.totalorder 1, %s18
      %p238 = scmp.lt.s32.totalorder %s18, 3
      %p239 = pnand %p237, %p238
      %p240 = pneg %p239
      // Predicated region
      $region29: #{tpu_custom_call.1} parent=5 // pred_check
        _
      $region30: #{tpu_custom_call.1} parent=5 // pred_check_branch
        %242 = sbr.rel (%p239) target = $region32
      $region31: #{tpu_custom_call.1} parent=5 // pred_region
        %s243 = ssub.s32 %s18, 1
        %s244 = sand.u32 %s52, 1
        %s245 = scalar_lea.sflag [#allocation6], %s244
        %s246 = sand.u32 %s52, 1
        %s247 = smul.addr %s246, 4
        %s248 = scalar_lea.vmem [#allocation5], %s247
        // Predicated region
        $region33: #{tpu_custom_call.1} parent=31 // pred_check
          %p249 = pneg %p65
        $region34: #{tpu_custom_call.1} parent=31 // pred_check_branch
          %251 = sbr.rel (%p249) target = $region36
        $region35: #{tpu_custom_call.1} parent=31 // pred_region
          %252 = dma.done %s245, 64
        $region36: #{tpu_custom_call.1} parent=31 // pred_fallthru
          _
        %s253 = sand.u32 %s23, 1
        %s254 = scalar_lea.sflag [#allocation9], %s253
        %s255 = sand.u32 %s84, 1
        %s256 = smul.addr %s255, 4
        %s257 = scalar_lea.vmem [#allocation8], %s256
        // Predicated region
        $region37: #{tpu_custom_call.1} parent=31 // pred_check
          %p258 = pneg %p97
        $region38: #{tpu_custom_call.1} parent=31 // pred_check_branch
          %260 = sbr.rel (%p258) target = $region40
        $region39: #{tpu_custom_call.1} parent=31 // pred_region
          %261 = dma.done %s254, 64
        $region40: #{tpu_custom_call.1} parent=31 // pred_fallthru
          _
        %s262 = sand.u32 %s23, 1
        %s263 = scalar_lea.sflag [#allocation9], %s262
        %s264 = sand.u32 %s116, 1
        %s265 = smul.addr %s264, 4
        %s266 = scalar_lea.vmem [#allocation10], %s265
        // Predicated region
        $region41: #{tpu_custom_call.1} parent=31 // pred_check
          %p267 = pneg %p129
        $region42: #{tpu_custom_call.1} parent=31 // pred_check_branch
          %269 = sbr.rel (%p267) target = $region44
        $region43: #{tpu_custom_call.1} parent=31 // pred_region
          %270 = dma.done %s263, 64
        $region44: #{tpu_custom_call.1} parent=31 // pred_fallthru
          _
        %s271 = sand.u32 %s52, 1
        %s272 = scalar_lea.sflag [#allocation6], %s271
        %s273 = sand.u32 %s52, 1
        %s274 = smul.addr %s273, 4
        %s275 = scalar_lea.vmem [#allocation5], %s274
        %p276 = pneg %p65
        %p277 = pneg %p62
        %s278 = sand.u32 %s23, 1
        %s279 = scalar_lea.sflag [#allocation9], %s278
        %s280 = sand.u32 %s84, 1
        %s281 = smul.addr %s280, 4
        %s282 = scalar_lea.vmem [#allocation8], %s281
        %p283 = pneg %p97
        %p284 = pneg %p94
        %s285 = sand.u32 %s23, 1
        %s286 = scalar_lea.sflag [#allocation9], %s285
        %s287 = sand.u32 %s116, 1
        %s288 = smul.addr %s287, 4
        %s289 = scalar_lea.vmem [#allocation10], %s288
        %p290 = pneg %p129
        %p291 = pneg %p126
        %p292 = pneg %p157
        %p293 = pneg %p154
        %s294 = sand.u32 %s144, 1
        %s295 = scalar_lea.sflag [#allocation7], %s294
        %s296 = sand.u32 %s144, 1
        %s297 = smul.addr %s296, 8
        %s298 = scalar_lea.vmem [#allocation11], %s297
        %p299 = scmp.lt.s32.totalorder %s30, %s29
        %s300 = scalar_select %p299, %s30, %s29
        %p301 = scmp.lt.s32.totalorder %s30, %s29
        %s302 = scalar_select %p301, %s30, %s29
        %p304 = scmp.eq.s32.totalorder %s30, 0
        // Predicated region
        $region45: #{tpu_custom_call.1} parent=31 // pred_check
          %p305 = pneg %p304
        $region46: #{tpu_custom_call.1} parent=31 // pred_check_branch
          %307 = sbr.rel (%p305) target = $region48
        $region47: #{tpu_custom_call.1} parent=31 // pred_region
          %vm308 = vcmask 7168
          %309 = vst.msk [vmem:[#allocation2] sm:$0xff] %vm308, -inf
          %310 = vst.msk [vmem:[#allocation3] sm:$0xff] %vm308, 0.0
          %vm311 = vcmask 130048
          %312 = vst.msk [vmem:[#allocation4] sm:$0xff] %vm311, 0.0
        $region48: #{tpu_custom_call.1} parent=31 // pred_fallthru
          _
        %p313 = scmp.le.s32.totalorder %s30, %s29
        // Predicated region
        $region49: #{tpu_custom_call.1} parent=31 // pred_check
          %p314 = pneg %p313
        $region50: #{tpu_custom_call.1} parent=31 // pred_check_branch
          %316 = sbr.rel (%p314) target = $region52
        $region51: #{tpu_custom_call.1} parent=31 // pred_region
          %v317 = vld [vmem:[%s248] sm:$0xf]
          %v318 = vld [vmem:[%s257] sm:$0xf]
          %v319 = vld [vmem:[%s266] sm:$0xf]
          %vm320 = vcmask 130048
          %v322 = vsel %vm320, %v317, 0
          %v325 = vsel %vm320, %v318, 0
          %327 = vmatprep.subr.bf16.mxu0 0
          %328 = vmatpush1.bf16.xpose.msra.mxu0 0
          %329 = vmatprep.subr.bf16.mxu0 0
          %330 = vmatpush1.bf16.xpose.msra.mxu0 0
          %331 = vmatprep.subr.bf16.mxu0 0
          %332 = vmatpush1.bf16.xpose.msra.mxu0 0
          %333 = vmatprep.subr.bf16.mxu0 0
          %334 = vmatpush1.bf16.xpose.msra.mxu0 0
          %335 = vmatprep.subr.bf16.mxu0 0
          %336 = vmatpush1.bf16.xpose.msra.mxu0 0
          %337 = vmatprep.subr.bf16.mxu0 0
          %338 = vmatpush1.bf16.xpose.msra.mxu0 0
          %339 = vmatprep.subr.bf16.mxu0 0
          %340 = vmatpush1.bf16.xpose.msra.mxu0 0
          %341 = vmatprep.subr.bf16.mxu0 0
          %342 = vmatpush1.bf16.xpose.msra.mxu0 %v325
          %343 = vmatprep.subr.bf16.mxu0 0
          %344 = vmatpush2.bf16.xpose.msra.mxu0 0
          %345 = vmatprep.subr.bf16.mxu0 0
          %346 = vmatpush2.bf16.xpose.msra.mxu0 0
          %347 = vmatprep.subr.bf16.mxu0 0
          %348 = vmatpush2.bf16.xpose.msra.mxu0 0
          %349 = vmatprep.subr.bf16.mxu0 0
          %350 = vmatpush2.bf16.xpose.msra.mxu0 0
          %351 = vmatprep.subr.bf16.mxu0 0
          %352 = vmatpush2.bf16.xpose.msra.mxu0 0
          %353 = vmatprep.subr.bf16.mxu0 0
          %354 = vmatpush2.bf16.xpose.msra.mxu0 0
          %355 = vmatprep.subr.bf16.mxu0 0
          %356 = vmatpush2.bf16.xpose.msra.mxu0 0
          %357 = vmatprep.subr.bf16.mxu0 0
          %358 = vmatpush2.bf16.xpose.msra.mxu0 0
          %359 = vmatprep.mubr.bf16.mxu0 0
          %360 = vmatmul.mubr.bf16.gmra.mxu0 %v322
          %v361 = vpop.f32.mrf.mxu0
          %v362 = vadd.f32 0.0, %v361
          %v363 = vpop.f32.mrf.mxu0
          %v364 = vpop.f32.mrf.mxu0
          %v365 = vpop.f32.mrf.mxu0
          %366 = vdwg.mxu0
          %s367 = smul.u32 %s29, 8
          %v368 = vlaneseq
          %v369 = vshrl.u32 %v368, 7
          %v370 = vstv %s367
          %v371 = vadd.s32 %v370, %v369
          %s372 = smul.u32 %s30, 8
          %v373 = vlaneseq
          %v374 = vand.u32 %v373, 127
          %v375 = vstv %s372
          %v376 = vadd.s32 %v375, %v374
          %vm377 = vcmp.le.s32.totalorder %v376, %v371
          %v378 = vsel %vm377, %v362, -inf
          %v379 = vld [vmem:[#allocation2] sm:$0xff]
          %vm380 = vcmask 64512
          %v381 = vsel %vm380, %v378, -inf
          %382 = vmax.xlane.f32.xlu0 %v381
          %v383 = vpop.xlane.xlu0 %382
          %v384 = vmax.f32 %v379, %v383
          %v385 = vsub.f32 %v379, %v384
          %v386 = vmul.f32 %v385, 1.442695
          %v387 = vpow.pop %v386
          %389 = vset.pattern.permute.xlu0 0
          %390 = vperm.xlu0 %389, %v384
          %v391 = vpop.permute.xlu0 %390
          %v393 = vsub.f32 %v378, %v391
          %v394 = vmul.f32 %v393, 1.442695
          %v395 = vpow.pop %v394
          %v396 = vsel %vm380, %v395, 0.0
          %397 = vadd.xlane.f32.xlu0 %v396
          %v398 = vpop.xlane.xlu0 %397
          %v399 = vpack.c.bf16 %v395, %v395
          %v400 = vld [vmem:[#allocation3] sm:$0xff]
          %v401 = vmul.f32 %v387, %v400
          %v402 = vadd.f32 %v401, %v398
          %vm403 = vcmask 7168
          %404 = vst.msk [vmem:[#allocation3] sm:$0xff] %vm403, %v402
          %v405 = vld [vmem:[#allocation4] sm:$0xff]
          %407 = vset.pattern.permute.xlu0 0
          %408 = vperm.xlu0 %407, %v387
          %v409 = vpop.permute.xlu0 %408
          %v411 = vmul.f32 %v409, %v405
          %v413 = vsel %vm380, %v399, 0
          %vm415 = vcmask 1043456
          %v417 = vsel %vm415, %v319, 0
          %419 = vmatprep.subr.bf16.mxu0 0
          %420 = vmatpush1.bf16.msra.mxu0 0
          %421 = vmatprep.subr.bf16.mxu0 0
          %422 = vmatpush1.bf16.msra.mxu0 0
          %423 = vmatprep.subr.bf16.mxu0 0
          %424 = vmatpush1.bf16.msra.mxu0 0
          %425 = vmatprep.subr.bf16.mxu0 0
          %426 = vmatpush1.bf16.msra.mxu0 0
          %427 = vmatprep.subr.bf16.mxu0 0
          %428 = vmatpush1.bf16.msra.mxu0 0
          %429 = vmatprep.subr.bf16.mxu0 0
          %430 = vmatpush1.bf16.msra.mxu0 0
          %431 = vmatprep.subr.bf16.mxu0 0
          %432 = vmatpush1.bf16.msra.mxu0 0
          %433 = vmatprep.subr.bf16.mxu0 0
          %434 = vmatpush1.bf16.msra.mxu0 %v417
          %435 = vmatprep.subr.bf16.mxu0 0
          %436 = vmatpush2.bf16.msra.mxu0 0
          %437 = vmatprep.subr.bf16.mxu0 0
          %438 = vmatpush2.bf16.msra.mxu0 0
          %439 = vmatprep.subr.bf16.mxu0 0
          %440 = vmatpush2.bf16.msra.mxu0 0
          %441 = vmatprep.subr.bf16.mxu0 0
          %442 = vmatpush2.bf16.msra.mxu0 0
          %443 = vmatprep.subr.bf16.mxu0 0
          %444 = vmatpush2.bf16.msra.mxu0 0
          %445 = vmatprep.subr.bf16.mxu0 0
          %446 = vmatpush2.bf16.msra.mxu0 0
          %447 = vmatprep.subr.bf16.mxu0 0
          %448 = vmatpush2.bf16.msra.mxu0 0
          %449 = vmatprep.subr.bf16.mxu0 0
          %450 = vmatpush2.bf16.msra.mxu0 0
          %451 = vmatprep.mubr.bf16.mxu0 0
          %452 = vmatmul.mubr.bf16.gmra.mxu0 %v413
          %v453 = vpop.f32.mrf.mxu0
          %v454 = vadd.f32 0.0, %v453
          %v455 = vpop.f32.mrf.mxu0
          %v456 = vpop.f32.mrf.mxu0
          %v457 = vpop.f32.mrf.mxu0
          %458 = vdwg.mxu0
          %v459 = vadd.f32 %v411, %v454
          %460 = vst.msk [vmem:[#allocation4] sm:$0xff] %vm320, %v459
          %461 = vst.msk [vmem:[#allocation2] sm:$0xff] %vm403, %v384
        $region52: #{tpu_custom_call.1} parent=31 // pred_fallthru
          _
        // Predicated region
        $region53: #{tpu_custom_call.1} parent=31 // pred_check
          %p462 = pneg %p304
        $region54: #{tpu_custom_call.1} parent=31 // pred_check_branch
          %464 = sbr.rel (%p462) target = $region56
        $region55: #{tpu_custom_call.1} parent=31 // pred_region
          %v465 = vld [vmem:[#allocation3] sm:$0xff]
          %v466 = vrcp.pop %v465
          %v467 = vld [vmem:[#allocation4] sm:$0xff]
          %469 = vset.pattern.permute.xlu0 0
          %470 = vperm.xlu0 %469, %v466
          %v471 = vpop.permute.xlu0 %470
          %v473 = vmul.f32 %v467, %v471
          %vm474 = vcmask 130048
          %475 = vst.msk [vmem:[%s298] sm:$0xff] %vm474, %v473
        $region56: #{tpu_custom_call.1} parent=31 // pred_fallthru
          _
        %s476 = sand.u32 %s144, 1
        %s477 = scalar_lea.sflag [#allocation7], %s476
        %s478 = sand.u32 %s144, 1
        %s479 = smul.addr %s478, 8
        %s480 = scalar_lea.vmem [#allocation11], %s479
        // Predicated region
        $region57: #{tpu_custom_call.1} parent=31 // pred_check
          %p481 = pneg %p154
        $region58: #{tpu_custom_call.1} parent=31 // pred_check_branch
          %483 = sbr.rel (%p481) target = $region60
        $region59: #{tpu_custom_call.1} parent=31 // pred_region
          %s485 = ssub.s32 128, 128
          %486 = vsyncadd %s477, %s485
          %s487 = sadd.s32 %s29, %s28
          %s488 = smul.addr %s487, 128
          %s489 = scalar_lea.hbm %s3, %s488
          %s491 = sshll.u32 %s480, 4
          %s492 = int_to_ptr.vmem [resolvable:$true] %s491
          %494 = dma.vmem_to_hbm [thread:$0]  %s492, 128, %s489, %s477
        $region60: #{tpu_custom_call.1} parent=31 // pred_fallthru
          _
      $region32: #{tpu_custom_call.1} parent=5 // pred_fallthru
        _
      %p495 = scmp.le.s32.totalorder 2, %s18
      // Predicated region
      $region61: #{tpu_custom_call.1} parent=5 // pred_check
        %p496 = pneg %p495
      $region62: #{tpu_custom_call.1} parent=5 // pred_check_branch
        %498 = sbr.rel (%p496) target = $region64
      $region63: #{tpu_custom_call.1} parent=5 // pred_region
        %s499 = ssub.s32 %s18, 2
        // Predicated region
        $region65: #{tpu_custom_call.1} parent=63 // pred_check
          %p500 = pneg %p160
        $region66: #{tpu_custom_call.1} parent=63 // pred_check_branch
          %502 = sbr.rel (%p500) target = $region68
        $region67: #{tpu_custom_call.1} parent=63 // pred_region
          %s503 = sand.u32 %s145, 1
          %s504 = scalar_lea.sflag [#allocation7], %s503
          %s505 = sand.u32 %s145, 1
          %s506 = smul.addr %s505, 8
          %s507 = scalar_lea.vmem [#allocation11], %s506
          %508 = dma.done %s504, 128
        $region68: #{tpu_custom_call.1} parent=63 // pred_fallthru
          _
      $region64: #{tpu_custom_call.1} parent=5 // pred_fallthru
        _
    $region6: #{tpu_custom_call.1} parent=1 // loop_footer
      %s22 = sadd.s32 1, %s18
    $region7: #{tpu_custom_call.1} parent=1 // loop_footer_branch
      %17 = sbr.rel target = $region3
    $region8: #{tpu_custom_call.1} parent=1 // loop_exit
      _
    %509 = vsyncpa [#allocation6], 1
    %s510 = scalar_lea.sflag [#allocation6], 1
    %511 = vsyncpa %s510, 1
    %512 = vsyncpa [#allocation9], 1
    %s513 = scalar_lea.sflag [#allocation9], 1
    %514 = vsyncpa %s513, 1
    %515 = vsyncpa [#allocation7], 1
    %s516 = scalar_lea.sflag [#allocation7], 1
    %517 = vsyncpa %s516, 1

</llo_original>
